<compile_context>
chip_gen: v7x
topology: tpu7x:2x2x1
jax: 0.10.0
libtpu: 0.0.40
codegen_flags: <defaults>
</compile_context>

<pallas_src>
import functools

import jax
import jax.numpy as jnp
from jax import lax
from jax.experimental import pallas as pl
from jax.experimental.pallas import tpu as pltpu

LN_EPS = 1e-5
INV_SQRT2 = 0.7071067811865476

_VMEM_BUDGET = 24 << 20   # resident weights + pipelined tiles must stay under this (v7x: 64 MiB physical)
_VMEM_CAP = 56 << 20      # never request more scoped VMEM than this


def _round_up(n, m):
    return ((n + m - 1) // m) * m


def _vmem_need_bytes(tile_b, e, p, x_dtype, w_dtype, out_dtype):
    w_bytes = (e * p + p * p) * jnp.dtype(w_dtype).itemsize            # W1 + W2 (single-buffered)
    param_bytes = 4 * p * 4                                            # packed (4, P) f32 params
    io_bytes = 2 * tile_b * (e * jnp.dtype(x_dtype).itemsize
                             + p * jnp.dtype(out_dtype).itemsize)      # double-buffered x / out tiles
    return w_bytes + param_bytes + io_bytes


def projection_head_kernel(x_ref, w1_ref, w2_ref, params_ref, o_ref, *, use_tanh_gelu):
    # Keep x/W in their native dtype (bf16 feeds the MXU directly); accumulate in f32.
    x = x_ref[...]

    b1 = params_ref[0:1, :]      # (1, P) f32
    b2 = params_ref[1:2, :]
    gamma = params_ref[2:3, :]
    beta = params_ref[3:4, :]

    # projection: Linear(embedding_dim -> projection_dim)
    projected = jnp.dot(x, w1_ref[...], preferred_element_type=jnp.float32) + b1

    if use_tanh_gelu:
        # tanh approximation runs on the EUP slot; ~1e-3 deviation vs torch's exact GELU.
        h = jax.nn.gelu(projected, approximate=True)
    else:
        # exact (erf) GELU, matches torch.nn.GELU() default
        h = 0.5 * projected * (1.0 + lax.erf(projected * INV_SQRT2))

    # fc: Linear(projection_dim -> projection_dim); dropout is identity at inference,
    # then the residual with `projected`.
    # TODO(synk): training-mode dropout (p=0.1) would need pltpu.prng_* masking.
    y = jnp.dot(h.astype(w2_ref.dtype), w2_ref[...],
                preferred_element_type=jnp.float32) + b2 + projected

    # LayerNorm over last dim (biased variance, eps=1e-5), affine gamma/beta
    mean = jnp.mean(y, axis=-1, keepdims=True)
    centered = y - mean
    var = jnp.mean(centered * centered, axis=-1, keepdims=True)
    normed = centered * lax.rsqrt(var + LN_EPS)
    o_ref[...] = (normed * gamma + beta).astype(o_ref.dtype)


def projection_head(x, w1, b1, w2, b2, gamma, beta, *, tile_b=256, use_tanh_gelu=False):
    B, E = x.shape
    P = w1.shape[1]
    out_dtype = x.dtype

    # Lane-dense K dim: zero-pad embedding dim (x cols / W1 rows) to a multiple of 128.
    E_pad = _round_up(E, 128)
    if E_pad != E:
        x = jnp.pad(x, ((0, 0), (0, E_pad - E)))
        w1 = jnp.pad(w1, ((0, E_pad - E), (0, 0)))

    # Batch tile: fill the MXU M dim, never exceed the (padded) batch, prefer >= 2
    # 'parallel' grid steps (v7x has 2 TensorCores/chip), and respect the VMEM budget.
    tile_b = max(8, _round_up(min(tile_b, _round_up(B, 8)), 8))
    if pl.cdiv(B, tile_b) < 2 and tile_b >= 16:
        tile_b = max(8, _round_up(pl.cdiv(B, 2), 8))
    while tile_b > 8 and _vmem_need_bytes(tile_b, E_pad, P, x.dtype, w1.dtype,
                                          out_dtype) > _VMEM_BUDGET:
        tile_b = max(8, _round_up(tile_b // 2, 8))

    B_pad = _round_up(B, tile_b)
    if B_pad != B:
        x = jnp.pad(x, ((0, B_pad - B), (0, 0)))
    grid = (B_pad // tile_b,)

    # Pack the four (P,) parameter vectors into one resident (4, P) f32 array.
    params = jnp.stack([b1.reshape(P), b2.reshape(P),
                        gamma.reshape(P), beta.reshape(P)]).astype(jnp.float32)

    need = _vmem_need_bytes(tile_b, E_pad, P, x.dtype, w1.dtype, out_dtype)
    vmem_limit = int(min(_VMEM_CAP, max(32 << 20, need + (16 << 20))))

    x_bytes = jnp.dtype(x.dtype).itemsize
    w_bytes = jnp.dtype(w1.dtype).itemsize
    o_bytes = jnp.dtype(out_dtype).itemsize
    cost = pl.CostEstimate(
        flops=2 * B_pad * E_pad * P + 2 * B_pad * P * P,
        transcendentals=B_pad * P,
        bytes_accessed=(B_pad * E_pad * x_bytes + (E_pad * P + P * P) * w_bytes
                        + 4 * P * 4 + B_pad * P * o_bytes),
    )

    resident = dict(pipeline_mode=pl.Buffered(1))   # constant index_map -> single buffer

    out = pl.pallas_call(
        functools.partial(projection_head_kernel, use_tanh_gelu=use_tanh_gelu),
        out_shape=jax.ShapeDtypeStruct((B_pad, P), out_dtype),
        grid_spec=pltpu.PrefetchScalarGridSpec(
            num_scalar_prefetch=0,
            grid=grid,
            in_specs=[
                pl.BlockSpec((tile_b, E_pad), lambda i: (i, 0)),          # x tile (pipelined)
                pl.BlockSpec((E_pad, P), lambda i: (0, 0), **resident),   # W1 (resident)
                pl.BlockSpec((P, P), lambda i: (0, 0), **resident),       # W2 (resident)
                pl.BlockSpec((4, P), lambda i: (0, 0), **resident),       # b1/b2/gamma/beta
            ],
            out_specs=pl.BlockSpec((tile_b, P), lambda i: (i, 0)),
        ),
        compiler_params=pltpu.CompilerParams(
            dimension_semantics=("parallel",),
            vmem_limit_bytes=vmem_limit),
        cost_estimate=cost,
    )(x, w1, w2, params)

    return out[:B] if B_pad != B else out


def reference(x, w1, b1, w2, b2, gamma, beta):
    xf = x.astype(jnp.float32)
    projected = xf @ w1.astype(jnp.float32) + b1
    h = jax.nn.gelu(projected, approximate=False)
    y = h @ w2.astype(jnp.float32) + b2
    y = y + projected
    mean = jnp.mean(y, axis=-1, keepdims=True)
    var = jnp.mean((y - mean) ** 2, axis=-1, keepdims=True)
    return ((y - mean) / jnp.sqrt(var + LN_EPS)) * gamma + beta


if __name__ == "__main__":
    # Small shapes consistent with the module: x is [batch, embedding_dim].
    # E kept lane-dense (multiple of 128); P = CFG.projection_dim = 256.
    B, E, P = 64, 128, 256

    key = jax.random.PRNGKey(0)
    kx, k1, k2, k3, k4 = jax.random.split(key, 5)

    x = jax.random.normal(kx, (B, E), dtype=jnp.float32)

    # deterministic synthetic parameters (weights stored as [in, out])
    w1 = jax.random.normal(k1, (E, P), dtype=jnp.float32) * (1.0 / jnp.sqrt(E))
    b1 = jax.random.normal(k2, (P,), dtype=jnp.float32) * 0.01
    w2 = jax.random.normal(k3, (P, P), dtype=jnp.float32) * (1.0 / jnp.sqrt(P))
    b2 = jax.random.normal(k4, (P,), dtype=jnp.float32) * 0.01
    gamma = jnp.ones((P,), dtype=jnp.float32)   # LayerNorm weight init
    beta = jnp.zeros((P,), dtype=jnp.float32)   # LayerNorm bias init

    out = projection_head(x, w1, b1, w2, b2, gamma, beta)
    out = jax.block_until_ready(out)

    ref = reference(x, w1, b1, w2, b2, gamma, beta)
    assert out.shape == (B, P)
    assert jnp.allclose(out, ref, atol=1e-4, rtol=1e-4), "mismatch vs reference"

    # Ragged-batch path: exercises batch padding + slice-back.
    out_ragged = projection_head(x[:50], w1, b1, w2, b2, gamma, beta)
    out_ragged = jax.block_until_ready(out_ragged)
    assert out_ragged.shape == (50, P)
    assert jnp.allclose(out_ragged, ref[:50], atol=1e-4, rtol=1e-4), "ragged mismatch"

    # bf16 deployment path: operands feed the MXU natively (no upcast), f32 accumulate.
    out_bf16 = projection_head(x.astype(jnp.bfloat16), w1.astype(jnp.bfloat16), b1,
                               w2.astype(jnp.bfloat16), b2, gamma, beta)
    out_bf16 = jax.block_until_ready(out_bf16)
    assert out_bf16.shape == (B, P)

    print("KERNEL_OK")
</pallas_src>

<mosaic_0001>
module attributes {stable_mosaic.version = 11 : i64} {
  func.func @projection_head_kernel(%arg0: i32, %arg1: memref<32x128xf32, #tpu.memory_space<vmem>>, %arg2: memref<128x256xf32, #tpu.memory_space<vmem>>, %arg3: memref<256x256xf32, #tpu.memory_space<vmem>>, %arg4: memref<4x256xf32, #tpu.memory_space<vmem>>, %arg5: memref<32x256xf32, #tpu.memory_space<vmem>>) attributes {dimension_semantics = [#tpu.dimension_semantics<parallel>], iteration_bounds = array<i64: 2>, scalar_prefetch = 0 : i64, scratch_operands = 0 : i64, tpu.core_type = #tpu.core_type<tc>, window_params = [{transform_indices = @transform_0, window_bounds = array<i64: 32, 128>}, {pipeline_mode = #tpu.pipeline_mode<synchronous>, transform_indices = @transform_1, window_bounds = array<i64: 128, 256>}, {pipeline_mode = #tpu.pipeline_mode<synchronous>, transform_indices = @transform_2, window_bounds = array<i64: 256, 256>}, {pipeline_mode = #tpu.pipeline_mode<synchronous>, transform_indices = @transform_3, window_bounds = array<i64: 4, 256>}, {transform_indices = @transform_4, window_bounds = array<i64: 32, 256>}]} {
    %c0 = arith.constant 0 : index
    %c0_0 = arith.constant 0 : index
    %0 = vector.load %arg1[%c0, %c0_0] : memref<32x128xf32, #tpu.memory_space<vmem>>, vector<32x128xf32>
    %c0_1 = arith.constant 0 : index
    %c0_2 = arith.constant 0 : index
    %1 = vector.load %arg4[%c0_1, %c0_2] : memref<4x256xf32, #tpu.memory_space<vmem>>, vector<1x256xf32>
    %c1 = arith.constant 1 : index
    %c0_3 = arith.constant 0 : index
    %2 = vector.load %arg4[%c1, %c0_3] : memref<4x256xf32, #tpu.memory_space<vmem>>, vector<1x256xf32>
    %c2 = arith.constant 2 : index
    %c0_4 = arith.constant 0 : index
    %3 = vector.load %arg4[%c2, %c0_4] : memref<4x256xf32, #tpu.memory_space<vmem>>, vector<1x256xf32>
    %c3 = arith.constant 3 : index
    %c0_5 = arith.constant 0 : index
    %4 = vector.load %arg4[%c3, %c0_5] : memref<4x256xf32, #tpu.memory_space<vmem>>, vector<1x256xf32>
    %c0_6 = arith.constant 0 : index
    %c0_7 = arith.constant 0 : index
    %5 = vector.load %arg2[%c0_6, %c0_7] : memref<128x256xf32, #tpu.memory_space<vmem>>, vector<128x256xf32>
    %cst = arith.constant dense<0.000000e+00> : vector<32x256xf32>
    %6 = tpu.matmul %0, %5, %cst {dimension_numbers = #tpu.dot_dimension_numbers<[1], [0], [0], [1], [0, 0, 1, 1], [], []>} : vector<32x128xf32>, vector<128x256xf32>, vector<32x256xf32> -> vector<32x256xf32>
    %7 = vector.broadcast %1 : vector<1x256xf32> to vector<32x256xf32>
    %8 = arith.addf %6, %7 : vector<32x256xf32>
    %cst_8 = arith.constant 5.000000e-01 : f32
    %9 = vector.broadcast %cst_8 : f32 to vector<32x256xf32>
    %10 = arith.mulf %9, %8 : vector<32x256xf32>
    %cst_9 = arith.constant 0.707106769 : f32
    %11 = vector.broadcast %cst_9 : f32 to vector<32x256xf32>
    %12 = arith.mulf %8, %11 : vector<32x256xf32>
    %13 = math.erf %12 : vector<32x256xf32>
    %cst_10 = arith.constant 1.000000e+00 : f32
    %14 = vector.broadcast %cst_10 : f32 to vector<32x256xf32>
    %15 = arith.addf %14, %13 : vector<32x256xf32>
    %16 = arith.mulf %10, %15 : vector<32x256xf32>
    %c0_11 = arith.constant 0 : index
    %c0_12 = arith.constant 0 : index
    %17 = vector.load %arg3[%c0_11, %c0_12] : memref<256x256xf32, #tpu.memory_space<vmem>>, vector<256x256xf32>
    %cst_13 = arith.constant dense<0.000000e+00> : vector<32x256xf32>
    %18 = tpu.matmul %16, %17, %cst_13 {dimension_numbers = #tpu.dot_dimension_numbers<[1], [0], [0], [1], [0, 0, 1, 1], [], []>} : vector<32x256xf32>, vector<256x256xf32>, vector<32x256xf32> -> vector<32x256xf32>
    %19 = vector.broadcast %2 : vector<1x256xf32> to vector<32x256xf32>
    %20 = arith.addf %18, %19 : vector<32x256xf32>
    %21 = arith.addf %20, %8 : vector<32x256xf32>
    %cst_14 = arith.constant dense<0.000000e+00> : vector<32xf32>
    %22 = vector.multi_reduction <add>, %21, %cst_14 [1] : vector<32x256xf32> to vector<32xf32>
    %23 = vector.shape_cast %22 : vector<32xf32> to vector<32x1xf32>
    %cst_15 = arith.constant 2.560000e+02 : f32
    %24 = vector.broadcast %cst_15 : f32 to vector<32x1xf32>
    %25 = arith.divf %23, %24 : vector<32x1xf32>
    %26 = vector.broadcast %25 : vector<32x1xf32> to vector<32x256xf32>
    %27 = arith.subf %21, %26 : vector<32x256xf32>
    %28 = arith.mulf %27, %27 : vector<32x256xf32>
    %cst_16 = arith.constant dense<0.000000e+00> : vector<32xf32>
    %29 = vector.multi_reduction <add>, %28, %cst_16 [1] : vector<32x256xf32> to vector<32xf32>
    %30 = vector.shape_cast %29 : vector<32xf32> to vector<32x1xf32>
    %cst_17 = arith.constant 2.560000e+02 : f32
    %31 = vector.broadcast %cst_17 : f32 to vector<32x1xf32>
    %32 = arith.divf %30, %31 : vector<32x1xf32>
    %cst_18 = arith.constant 9.99999974E-6 : f32
    %33 = vector.broadcast %cst_18 : f32 to vector<32x1xf32>
    %34 = arith.addf %32, %33 : vector<32x1xf32>
    %35 = math.rsqrt %34 : vector<32x1xf32>
    %36 = vector.broadcast %35 : vector<32x1xf32> to vector<32x256xf32>
    %37 = arith.mulf %27, %36 : vector<32x256xf32>
    %38 = vector.broadcast %3 : vector<1x256xf32> to vector<32x256xf32>
    %39 = arith.mulf %37, %38 : vector<32x256xf32>
    %40 = vector.broadcast %4 : vector<1x256xf32> to vector<32x256xf32>
    %41 = arith.addf %39, %40 : vector<32x256xf32>
    %c0_19 = arith.constant 0 : index
    %c0_20 = arith.constant 0 : index
    %42 = vector.load %arg5[%c0_19, %c0_20] : memref<32x256xf32, #tpu.memory_space<vmem>>, vector<32x256xf32>
    tpu.vector_store %arg5[%c0_19, %c0_20], %41 {strides = array<i32>} : memref<32x256xf32, #tpu.memory_space<vmem>>, vector<32x256xf32>,
    return
  }
  func.func @transform_0(%arg0: i32) -> (i32, i32) {
    %c0_i32 = arith.constant 0 : i32
    %c0_i32_0 = arith.constant 0 : i32
    return %arg0, %c0_i32 : i32, i32
  }
  func.func @transform_1(%arg0: i32) -> (i32, i32) {
    %c0_i32 = arith.constant 0 : i32
    %c0_i32_0 = arith.constant 0 : i32
    %c0_i32_1 = arith.constant 0 : i32
    return %c0_i32, %c0_i32_0 : i32, i32
  }
  func.func @transform_2(%arg0: i32) -> (i32, i32) {
    %c0_i32 = arith.constant 0 : i32
    %c0_i32_0 = arith.constant 0 : i32
    %c0_i32_1 = arith.constant 0 : i32
    return %c0_i32, %c0_i32_0 : i32, i32
  }
  func.func @transform_3(%arg0: i32) -> (i32, i32) {
    %c0_i32 = arith.constant 0 : i32
    %c0_i32_0 = arith.constant 0 : i32
    %c0_i32_1 = arith.constant 0 : i32
    return %c0_i32, %c0_i32_0 : i32, i32
  }
  func.func @transform_4(%arg0: i32) -> (i32, i32) {
    %c0_i32 = arith.constant 0 : i32
    %c0_i32_0 = arith.constant 0 : i32
    return %arg0, %c0_i32 : i32, i32
  }
}

</mosaic_0001>

<llo_original>
// kernel: tpu_custom_call.1
$region0: #{tpu_custom_call.1}
  #allocation0 [shape = 'u32[]', space=smem, size = 0x4, offset = 0x4, fixed_abs, tag = 'smem constant byte address 0x4 - core index']
  #allocation1 [shape = 'u32[144,128]{1,0:T(1,128)}', space=vmem, size = 0x12000, scoped, tag = 'internal scratch']
  %s0 = inlined_call_operand.hbm [shape: f32[64,128], index: 0, kind: input, shape index: {}]
  %s1 = inlined_call_operand.hbm [shape: f32[128,256], index: 1, kind: input, shape index: {}]
  %s2 = inlined_call_operand.hbm [shape: f32[256,256], index: 2, kind: input, shape index: {}]
  %s3 = inlined_call_operand.vmem [shape: f32[4,256], index: 3, kind: input, shape index: {}]
  %s4 = inlined_call_operand.hbm [shape: f32[64,256], index: 4, kind: output, shape index: {}]
  %s5 = sld [smem:[#allocation0]]
  $region61: #{tpu_custom_call.1} parent=0
    _
  %s7 = ssub.s32 1, %s5
  %s8 = scalar_select 0, %s7, %s5
  $region1: #{tpu_custom_call.1} parent=0
    #allocation2 [shape = 'u8[32768]{0}', space=vmem, size = 0x8000, scoped, tag = 'input window, operand 0']
    #allocation3 [shape = 's32[2]{0}', space=sflag, size = 0x8, scoped, tag = 'scoped memory for tpu_custom_call.1']
    #allocation4 [shape = 's32[2]{0}', space=sflag, size = 0x8, scoped, tag = 'scoped memory for tpu_custom_call.1']
    #allocation5 [shape = 'u8[131072]{0}', space=vmem, size = 0x20000, scoped, tag = 'input window, operand 1, single buffered']
    #allocation6 [shape = 's32[1]{0}', space=sflag, size = 0x4, scoped, tag = 'scoped memory for tpu_custom_call.1']
    #allocation7 [shape = 'u8[262144]{0}', space=vmem, size = 0x40000, scoped, tag = 'input window, operand 2, single buffered']
    #allocation8 [shape = 'u8[65536]{0}', space=vmem, size = 0x10000, scoped, tag = 'output window, operand 0']
    %9 = vsyncpa [#allocation3], 0
    %s10 = scalar_lea.sflag [#allocation3], 1
    %11 = vsyncpa %s10, 0
    %12 = vsyncpa [#allocation6], 0
    %13 = vsyncpa [#allocation4], 0
    %s14 = scalar_lea.sflag [#allocation4], 1
    %15 = vsyncpa %s14, 0
    loop: start=0, step=1, limit=4
    $region2: #{tpu_custom_call.1} parent=1 // loop_pre_header
      _
    $region3: #{tpu_custom_call.1} parent=1 // loop_header
      %s17 = sphi 0, %s21
      %p18 = scmp.ge.s32.totalorder %s17, 4
      %s27 = sphi 0, %s29
      %s30 = sphi 0, %s27
      %s31 = sphi 0, %s30
      %s47 = sphi 0, %s31
      %s51 = sphi 0, %s51
      %s53 = sphi 0, %s51
      %s54 = sphi 0, %s53
      %s68 = sphi 0, %s54
      %s72 = sphi 0, %s72
      %s74 = sphi 0, %s72
      %s75 = sphi 0, %s74
      %s89 = sphi 0, %s75
      %s93 = sphi 0, %s93
      %s95 = sphi 0, %s93
      %s96 = sphi 0, %s95
      %s110 = sphi 0, %s96
      %s116 = sphi 0, %s118
      %s119 = sphi 0, %s116
      %s120 = sphi 0, %s119
      %s136 = sphi 0, %s120
    $region4: #{tpu_custom_call.1} parent=1 // loop_header_branch
      %20 = sbr.rel (%p18) target = $region8
    $region5: #{tpu_custom_call.1} parent=1 // loop_body
      %s22 = ssub.s32 %s17, 1
      %s23 = ssub.s32 %s17, 2
      %s24 = sadd.s32 %s17, 1
      %s25 = ssub.s32 %s17, %s24
      %p26 = scmp.eq.s32.totalorder %s25, 0
      %s28 = sadd.s32 %s27, 1
      %s29 = scalar_select %p26, %s27, %s28
      %p32 = pneg %p26
      %p33 = scmp.eq.s32.totalorder %s17, 1
      %p34 = por %p32, %p33
      %p35 = scmp.ne.s32.totalorder %s27, %s30
      %p36 = scmp.eq.s32.totalorder %s17, 0
      %p37 = por %p35, %p36
      %p38 = scmp.ne.s32.totalorder %s27, %s30
      %p39 = scmp.eq.s32.totalorder %s22, 1
      %p40 = por %p38, %p39
      %p41 = scmp.ne.s32.totalorder %s30, %s31
      %p42 = scmp.eq.s32.totalorder %s22, 0
      %p43 = por %p41, %p42
      %p44 = scmp.ne.s32.totalorder %s30, %s31
      %p45 = scmp.eq.s32.totalorder %s23, 1
      %p46 = por %p44, %p45
      %p48 = scmp.ne.s32.totalorder %s31, %s47
      %p49 = scmp.eq.s32.totalorder %s23, 0
      %p50 = por %p48, %p49
      %s52 = sadd.s32 %s51, 1
      %p55 = scmp.eq.s32.totalorder %s17, 1
      %p56 = scmp.ne.s32.totalorder %s51, %s53
      %p57 = scmp.eq.s32.totalorder %s17, 0
      %p58 = por %p56, %p57
      %p59 = scmp.ne.s32.totalorder %s51, %s53
      %p60 = scmp.eq.s32.totalorder %s22, 1
      %p61 = por %p59, %p60
      %p62 = scmp.ne.s32.totalorder %s53, %s54
      %p63 = scmp.eq.s32.totalorder %s22, 0
      %p64 = por %p62, %p63
      %p65 = scmp.ne.s32.totalorder %s53, %s54
      %p66 = scmp.eq.s32.totalorder %s23, 1
      %p67 = por %p65, %p66
      %p69 = scmp.ne.s32.totalorder %s54, %s68
      %p70 = scmp.eq.s32.totalorder %s23, 0
      %p71 = por %p69, %p70
      %s73 = sadd.s32 %s72, 1
      %p76 = scmp.eq.s32.totalorder %s17, 1
      %p77 = scmp.ne.s32.totalorder %s72, %s74
      %p78 = scmp.eq.s32.totalorder %s17, 0
      %p79 = por %p77, %p78
      %p80 = scmp.ne.s32.totalorder %s72, %s74
      %p81 = scmp.eq.s32.totalorder %s22, 1
      %p82 = por %p80, %p81
      %p83 = scmp.ne.s32.totalorder %s74, %s75
      %p84 = scmp.eq.s32.totalorder %s22, 0
      %p85 = por %p83, %p84
      %p86 = scmp.ne.s32.totalorder %s74, %s75
      %p87 = scmp.eq.s32.totalorder %s23, 1
      %p88 = por %p86, %p87
      %p90 = scmp.ne.s32.totalorder %s75, %s89
      %p91 = scmp.eq.s32.totalorder %s23, 0
      %p92 = por %p90, %p91
      %s94 = sadd.s32 %s93, 1
      %p97 = scmp.eq.s32.totalorder %s17, 1
      %p98 = scmp.ne.s32.totalorder %s93, %s95
      %p99 = scmp.eq.s32.totalorder %s17, 0
      %p100 = por %p98, %p99
      %p101 = scmp.ne.s32.totalorder %s93, %s95
      %p102 = scmp.eq.s32.totalorder %s22, 1
      %p103 = por %p101, %p102
      %p104 = scmp.ne.s32.totalorder %s95, %s96
      %p105 = scmp.eq.s32.totalorder %s22, 0
      %p106 = por %p104, %p105
      %p107 = scmp.ne.s32.totalorder %s95, %s96
      %p108 = scmp.eq.s32.totalorder %s23, 1
      %p109 = por %p107, %p108
      %p111 = scmp.ne.s32.totalorder %s96, %s110
      %p112 = scmp.eq.s32.totalorder %s23, 0
      %p113 = por %p111, %p112
      %s114 = ssub.s32 %s17, %s24
      %p115 = scmp.eq.s32.totalorder %s114, 0
      %s117 = sadd.s32 %s116, 1
      %s118 = scalar_select %p115, %s116, %s117
      %p121 = pneg %p115
      %p122 = scmp.eq.s32.totalorder %s17, 1
      %p123 = por %p121, %p122
      %p124 = scmp.ne.s32.totalorder %s116, %s119
      %p125 = scmp.eq.s32.totalorder %s17, 0
      %p126 = por %p124, %p125
      %p127 = scmp.ne.s32.totalorder %s116, %s119
      %p128 = scmp.eq.s32.totalorder %s22, 1
      %p129 = por %p127, %p128
      %p130 = scmp.ne.s32.totalorder %s119, %s120
      %p131 = scmp.eq.s32.totalorder %s22, 0
      %p132 = por %p130, %p131
      %p133 = scmp.ne.s32.totalorder %s119, %s120
      %p134 = scmp.eq.s32.totalorder %s23, 1
      %p135 = por %p133, %p134
      %p137 = scmp.ne.s32.totalorder %s120, %s136
      %p138 = scmp.eq.s32.totalorder %s23, 0
      %p139 = por %p137, %p138
      %p140 = scmp.le.s32.totalorder 1, %s17
      %p141 = scmp.lt.s32.totalorder %s17, 3
      %p142 = pnand %p140, %p141
      %p143 = pneg %p142
      // Predicated region
      $region9: #{tpu_custom_call.1} parent=5 // pred_check
        _
      $region10: #{tpu_custom_call.1} parent=5 // pred_check_branch
        %145 = sbr.rel (%p142) target = $region12
      $region11: #{tpu_custom_call.1} parent=5 // pred_region
        %s146 = ssub.s32 %s17, 1
        // Predicated region
        $region13: #{tpu_custom_call.1} parent=11 // pred_check
          %p147 = pneg %p64
        $region14: #{tpu_custom_call.1} parent=11 // pred_check_branch
          %149 = sbr.rel (%p147) target = $region16
        $region15: #{tpu_custom_call.1} parent=11 // pred_region
          %s151 = ssub.s32 4096, 4096
          %152 = vsyncadd [#allocation6], %s151
          %s153 = sshll.u32 [#allocation5], 4
          %s154 = int_to_ptr.vmem [resolvable:$true] %s153
          %159 = dma.hbm_to_vmem [thread:$0]  %s1, 4096, %s154, [#allocation6], 256, 256, 16
        $region16: #{tpu_custom_call.1} parent=11 // pred_fallthru
          _
        // Predicated region
        $region17: #{tpu_custom_call.1} parent=11 // pred_check
          %p160 = pneg %p85
        $region18: #{tpu_custom_call.1} parent=11 // pred_check_branch
          %162 = sbr.rel (%p160) target = $region20
        $region19: #{tpu_custom_call.1} parent=11 // pred_region
          %s164 = ssub.s32 8192, 8192
          %165 = vsyncadd [#allocation6], %s164
          %s166 = sshll.u32 [#allocation7], 4
          %s167 = int_to_ptr.vmem [resolvable:$true] %s166
          %172 = dma.hbm_to_vmem [thread:$0]  %s2, 8192, %s167, [#allocation6], 256, 256, 16
        $region20: #{tpu_custom_call.1} parent=11 // pred_fallthru
          _
        // Predicated region
        $region21: #{tpu_custom_call.1} parent=11 // pred_check
          %p173 = pneg %p106
        $region22: #{tpu_custom_call.1} parent=11 // pred_check_branch
          %175 = sbr.rel (%p173) target = $region24
        $region23: #{tpu_custom_call.1} parent=11 // pred_region
          _
        $region24: #{tpu_custom_call.1} parent=11 // pred_fallthru
          _
      $region12: #{tpu_custom_call.1} parent=5 // pred_fallthru
        _
      %p176 = scmp.lt.s32.totalorder %s17, 2
      // Predicated region
      $region25: #{tpu_custom_call.1} parent=5 // pred_check
        %p177 = pneg %p176
      $region26: #{tpu_custom_call.1} parent=5 // pred_check_branch
        %179 = sbr.rel (%p177) target = $region28
      $region27: #{tpu_custom_call.1} parent=5 // pred_region
        // Predicated region
        $region29: #{tpu_custom_call.1} parent=27 // pred_check
          %p180 = pneg %p37
        $region30: #{tpu_custom_call.1} parent=27 // pred_check_branch
          %182 = sbr.rel (%p180) target = $region32
        $region31: #{tpu_custom_call.1} parent=27 // pred_region
          %s183 = sand.u32 %s27, 1
          %s184 = scalar_lea.sflag [#allocation3], %s183
          %s185 = sand.u32 %s27, 1
          %s186 = smul.addr %s185, 32
          %s187 = scalar_lea.vmem [#allocation2], %s186
          %s188 = smul.u32 4, %s17
          %s190 = ssub.s32 512, 512
          %191 = vsyncadd %s184, %s190
          %s192 = smul.addr %s188, 128
          %s193 = scalar_lea.hbm %s0, %s192
          %s194 = sshll.u32 %s187, 4
          %s195 = int_to_ptr.vmem [resolvable:$true] %s194
          %200 = dma.hbm_to_vmem [thread:$0]  %s193, 512, %s195, %s184, 128, 128, 8
        $region32: #{tpu_custom_call.1} parent=27 // pred_fallthru
          _
      $region28: #{tpu_custom_call.1} parent=5 // pred_fallthru
        _
      %p201 = scmp.le.s32.totalorder 1, %s17
      %p202 = scmp.lt.s32.totalorder %s17, 3
      %p203 = pnand %p201, %p202
      %p204 = pneg %p203
      // Predicated region
      $region33: #{tpu_custom_call.1} parent=5 // pred_check
        _
      $region34: #{tpu_custom_call.1} parent=5 // pred_check_branch
        %206 = sbr.rel (%p203) target = $region36
      $region35: #{tpu_custom_call.1} parent=5 // pred_region
        %s207 = ssub.s32 %s17, 1
        %s208 = sand.u32 %s30, 1
        %s209 = scalar_lea.sflag [#allocation3], %s208
        %s210 = sand.u32 %s30, 1
        %s211 = smul.addr %s210, 32
        %s212 = scalar_lea.vmem [#allocation2], %s211
        // Predicated region
        $region37: #{tpu_custom_call.1} parent=35 // pred_check
          %p213 = pneg %p43
        $region38: #{tpu_custom_call.1} parent=35 // pred_check_branch
          %215 = sbr.rel (%p213) target = $region40
        $region39: #{tpu_custom_call.1} parent=35 // pred_region
          %216 = dma.done %s209, 512
        $region40: #{tpu_custom_call.1} parent=35 // pred_fallthru
          _
        // Predicated region
        $region41: #{tpu_custom_call.1} parent=35 // pred_check
          %p217 = pneg %p64
        $region42: #{tpu_custom_call.1} parent=35 // pred_check_branch
          %219 = sbr.rel (%p217) target = $region44
        $region43: #{tpu_custom_call.1} parent=35 // pred_region
          %220 = dma.done [#allocation6], 4096
        $region44: #{tpu_custom_call.1} parent=35 // pred_fallthru
          _
        // Predicated region
        $region45: #{tpu_custom_call.1} parent=35 // pred_check
          %p221 = pneg %p85
        $region46: #{tpu_custom_call.1} parent=35 // pred_check_branch
          %223 = sbr.rel (%p221) target = $region48
        $region47: #{tpu_custom_call.1} parent=35 // pred_region
          %224 = dma.done [#allocation6], 8192
        $region48: #{tpu_custom_call.1} parent=35 // pred_fallthru
          _
        %s225 = sand.u32 %s30, 1
        %s226 = scalar_lea.sflag [#allocation3], %s225
        %s227 = sand.u32 %s30, 1
        %s228 = smul.addr %s227, 32
        %s229 = scalar_lea.vmem [#allocation2], %s228
        %p230 = pneg %p43
        %p231 = pneg %p40
        %p232 = pneg %p64
        %p233 = pneg %p61
        %p234 = pneg %p85
        %p235 = pneg %p82
        %p236 = pneg %p106
        %p237 = pneg %p103
        %p238 = pneg %p132
        %p239 = pneg %p129
        %s240 = sand.u32 %s119, 1
        %s241 = scalar_lea.sflag [#allocation4], %s240
        %s242 = sand.u32 %s119, 1
        %s243 = smul.addr %s242, 64
        %s244 = scalar_lea.vmem [#allocation8], %s243
        %s245 = smul.u32 4, %s22
        %s246 = smul.u32 4, %s22
        %v247 = vld [vmem:[%s212] sm:$0xff]
        %v248 = vld [vmem:[%s212 + $0x8] sm:$0xff]
        %v249 = vld [vmem:[%s212 + $0x10] sm:$0xff]
        %v250 = vld [vmem:[%s212 + $0x18] sm:$0xff]
        %v251 = vld [vmem:[%s3] ss:$4 sm:$0x3]
        %s252 = scalar_lea.vmem %s3, 1
        %v253 = vld [vmem:[%s252] ss:$4 sm:$0x3]
        %s254 = scalar_lea.vmem %s3, 2
        %v255 = vld [vmem:[%s254] ss:$4 sm:$0x3]
        %s256 = scalar_lea.vmem %s3, 3
        %v257 = vld [vmem:[%s256] ss:$4 sm:$0x3]
        %v258 = vld [vmem:[#allocation5] sm:$0xff]
        %v259 = vld [vmem:[#allocation5 + $0x8] sm:$0xff]
        %v260 = vld [vmem:[#allocation5 + $0x10] sm:$0xff]
        %v261 = vld [vmem:[#allocation5 + $0x18] sm:$0xff]
        %v262 = vld [vmem:[#allocation5 + $0x20] sm:$0xff]
        %v263 = vld [vmem:[#allocation5 + $0x28] sm:$0xff]
        %v264 = vld [vmem:[#allocation5 + $0x30] sm:$0xff]
        %v265 = vld [vmem:[#allocation5 + $0x38] sm:$0xff]
        %v266 = vld [vmem:[#allocation5 + $0x40] sm:$0xff]
        %v267 = vld [vmem:[#allocation5 + $0x48] sm:$0xff]
        %v268 = vld [vmem:[#allocation5 + $0x50] sm:$0xff]
        %v269 = vld [vmem:[#allocation5 + $0x58] sm:$0xff]
        %v270 = vld [vmem:[#allocation5 + $0x60] sm:$0xff]
        %v271 = vld [vmem:[#allocation5 + $0x68] sm:$0xff]
        %v272 = vld [vmem:[#allocation5 + $0x70] sm:$0xff]
        %v273 = vld [vmem:[#allocation5 + $0x78] sm:$0xff]
        %v274 = vld [vmem:[#allocation5 + $0x80] sm:$0xff]
        %v275 = vld [vmem:[#allocation5 + $0x88] sm:$0xff]
        %v276 = vld [vmem:[#allocation5 + $0x90] sm:$0xff]
        %v277 = vld [vmem:[#allocation5 + $0x98] sm:$0xff]
        %v278 = vld [vmem:[#allocation5 + $0xa0] sm:$0xff]
        %v279 = vld [vmem:[#allocation5 + $0xa8] sm:$0xff]
        %v280 = vld [vmem:[#allocation5 + $0xb0] sm:$0xff]
        %v281 = vld [vmem:[#allocation5 + $0xb8] sm:$0xff]
        %v282 = vld [vmem:[#allocation5 + $0xc0] sm:$0xff]
        %v283 = vld [vmem:[#allocation5 + $0xc8] sm:$0xff]
        %v284 = vld [vmem:[#allocation5 + $0xd0] sm:$0xff]
        %v285 = vld [vmem:[#allocation5 + $0xd8] sm:$0xff]
        %v286 = vld [vmem:[#allocation5 + $0xe0] sm:$0xff]
        %v287 = vld [vmem:[#allocation5 + $0xe8] sm:$0xff]
        %v288 = vld [vmem:[#allocation5 + $0xf0] sm:$0xff]
        %v289 = vld [vmem:[#allocation5 + $0xf8] sm:$0xff]
        %v291 = vlaneseq
        %v292 = vshrl.u32 %v291, 7
        %v293 = vsub.s32 0, %v292
        %v294 = vrot.slane %v251, %v293
        %v295 = vlaneseq
        %v296 = vshrl.u32 %v295, 7
        %v297 = vsub.s32 1, %v296
        %v298 = vrot.slane %v251, %v297
        %301 = vmatprep.subr.mxu0 %v259
        %302 = vmatpush1.msra.mxu0 %v258
        %303 = vmatprep.subr.mxu0 %v261
        %304 = vmatpush1.msra.mxu0 %v260
        %305 = vmatprep.subr.mxu0 %v263
        %306 = vmatpush1.msra.mxu0 %v262
        %307 = vmatprep.subr.mxu0 %v265
        %308 = vmatpush1.msra.mxu0 %v264
        %309 = vmatprep.subr.mxu0 %v267
        %310 = vmatpush1.msra.mxu0 %v266
        %311 = vmatprep.subr.mxu0 %v269
        %312 = vmatpush1.msra.mxu0 %v268
        %313 = vmatprep.subr.mxu0 %v271
        %314 = vmatpush1.msra.mxu0 %v270
        %315 = vmatprep.subr.mxu0 %v273
        %316 = vmatpush1.msra.mxu0 %v272
        %317 = vmatprep.subr.mxu0 %v275
        %318 = vmatpush1.msra.mxu0 %v274
        %319 = vmatprep.subr.mxu0 %v277
        %320 = vmatpush1.msra.mxu0 %v276
        %321 = vmatprep.subr.mxu0 %v279
        %322 = vmatpush1.msra.mxu0 %v278
        %323 = vmatprep.subr.mxu0 %v281
        %324 = vmatpush1.msra.mxu0 %v280
        %325 = vmatprep.subr.mxu0 %v283
        %326 = vmatpush1.msra.mxu0 %v282
        %327 = vmatprep.subr.mxu0 %v285
        %328 = vmatpush1.msra.mxu0 %v284
        %329 = vmatprep.subr.mxu0 %v287
        %330 = vmatpush1.msra.mxu0 %v286
        %331 = vmatprep.subr.mxu0 %v289
        %332 = vmatpush1.msra.mxu0 %v288
        %333 = vmatprep.subr.mxu0 0.0
        %334 = vmatpush1.msra.mxu0 0.0
        %335 = vmatprep.subr.mxu0 0.0
        %336 = vmatpush1.msra.mxu0 0.0
        %337 = vmatprep.subr.mxu0 0.0
        %338 = vmatpush1.msra.mxu0 0.0
        %339 = vmatprep.subr.mxu0 0.0
        %340 = vmatpush1.msra.mxu0 0.0
        %341 = vmatprep.subr.mxu0 0.0
        %342 = vmatpush1.msra.mxu0 0.0
        %343 = vmatprep.subr.mxu0 0.0
        %344 = vmatpush1.msra.mxu0 0.0
        %345 = vmatprep.subr.mxu0 0.0
        %346 = vmatpush1.msra.mxu0 0.0
        %347 = vmatprep.subr.mxu0 0.0
        %348 = vmatpush1.msra.mxu0 0.0
        %349 = vmatprep.subr.mxu0 0.0
        %350 = vmatpush1.msra.mxu0 0.0
        %351 = vmatprep.subr.mxu0 0.0
        %352 = vmatpush1.msra.mxu0 0.0
        %353 = vmatprep.subr.mxu0 0.0
        %354 = vmatpush1.msra.mxu0 0.0
        %355 = vmatprep.subr.mxu0 0.0
        %356 = vmatpush1.msra.mxu0 0.0
        %357 = vmatprep.subr.mxu0 0.0
        %358 = vmatpush1.msra.mxu0 0.0
        %359 = vmatprep.subr.mxu0 0.0
        %360 = vmatpush1.msra.mxu0 0.0
        %361 = vmatprep.subr.mxu0 0.0
        %362 = vmatpush1.msra.mxu0 0.0
        %363 = vmatprep.subr.mxu0 0.0
        %364 = vmatpush1.msra.mxu0 0.0
        %365 = vmatprep.mubr.f32.mxu0 0.0
        %366 = vmatmul.mubr.f32.gmra.mrb[0].mxu0 %v247
        %v367 = vpop.f32.mrb[0].mxu0
        %v368 = vadd.f32 %v294, %v367
        %v369 = vpop.f32.mrb[0].mxu0
        %v370 = vadd.f32 %v298, %v369
        %371 = vmatprep.mubr.f32.mxu0 0.0
        %372 = vmatmul.mubr.f32.gmra.mrb[0].mxu0 %v248
        %v373 = vpop.f32.mrb[0].mxu0
        %v374 = vadd.f32 %v294, %v373
        %v375 = vpop.f32.mrb[0].mxu0
        %v376 = vadd.f32 %v298, %v375
        %377 = vmatprep.mubr.f32.mxu0 0.0
        %378 = vmatmul.mubr.f32.gmra.mrb[0].mxu0 %v249
        %v379 = vpop.f32.mrb[0].mxu0
        %v380 = vadd.f32 %v294, %v379
        %v381 = vpop.f32.mrb[0].mxu0
        %v382 = vadd.f32 %v298, %v381
        %383 = vmatprep.mubr.f32.mxu0 0.0
        %384 = vmatmul.mubr.f32.gmra.mrb[0].mxu0 %v250
        %v385 = vpop.f32.mrb[0].mxu0
        %v386 = vadd.f32 %v294, %v385
        %v387 = vpop.f32.mrb[0].mxu0
        %v388 = vadd.f32 %v298, %v387
        %389 = vdwg.mxu0
        %v390 = vmul.f32 %v368, 0.5
        %v391 = vmul.f32 %v370, 0.5
        %v392 = vmul.f32 %v374, 0.5
        %v393 = vmul.f32 %v376, 0.5
        %v394 = vmul.f32 %v380, 0.5
        %v395 = vmul.f32 %v382, 0.5
        %v396 = vmul.f32 %v386, 0.5
        %v397 = vmul.f32 %v388, 0.5
        %v398 = vmul.f32 %v368, 0.70710677
        %v399 = vmul.f32 %v370, 0.70710677
        %v400 = vmul.f32 %v374, 0.70710677
        %v401 = vmul.f32 %v376, 0.70710677
        %v402 = vmul.f32 %v380, 0.70710677
        %v403 = vmul.f32 %v382, 0.70710677
        %v404 = vmul.f32 %v386, 0.70710677
        %v405 = vmul.f32 %v388, 0.70710677
        %v406 = verf.f32.pop %v398
        %v407 = verf.f32.pop %v399
        %v408 = verf.f32.pop %v400
        %v409 = verf.f32.pop %v401
        %v410 = verf.f32.pop %v402
        %v411 = verf.f32.pop %v403
        %v412 = verf.f32.pop %v404
        %v413 = verf.f32.pop %v405
        %v414 = vadd.f32 %v406, 1.0
        %v415 = vadd.f32 %v407, 1.0
        %v416 = vadd.f32 %v408, 1.0
        %v417 = vadd.f32 %v409, 1.0
        %v418 = vadd.f32 %v410, 1.0
        %v419 = vadd.f32 %v411, 1.0
        %v420 = vadd.f32 %v412, 1.0
        %v421 = vadd.f32 %v413, 1.0
        %v422 = vmul.f32 %v390, %v414
        %v423 = vmul.f32 %v391, %v415
        %v424 = vmul.f32 %v392, %v416
        %v425 = vmul.f32 %v393, %v417
        %v426 = vmul.f32 %v394, %v418
        %v427 = vmul.f32 %v395, %v419
        %v428 = vmul.f32 %v396, %v420
        %v429 = vmul.f32 %v397, %v421
        %v430 = vld [vmem:[#allocation7] sm:$0xff]
        %v431 = vld [vmem:[#allocation7 + $0x8] sm:$0xff]
        %v432 = vld [vmem:[#allocation7 + $0x10] sm:$0xff]
        %v433 = vld [vmem:[#allocation7 + $0x18] sm:$0xff]
        %v434 = vld [vmem:[#allocation7 + $0x20] sm:$0xff]
        %v435 = vld [vmem:[#allocation7 + $0x28] sm:$0xff]
        %v436 = vld [vmem:[#allocation7 + $0x30] sm:$0xff]
        %v437 = vld [vmem:[#allocation7 + $0x38] sm:$0xff]
        %v438 = vld [vmem:[#allocation7 + $0x40] sm:$0xff]
        %v439 = vld [vmem:[#allocation7 + $0x48] sm:$0xff]
        %v440 = vld [vmem:[#allocation7 + $0x50] sm:$0xff]
        %v441 = vld [vmem:[#allocation7 + $0x58] sm:$0xff]
        %v442 = vld [vmem:[#allocation7 + $0x60] sm:$0xff]
        %v443 = vld [vmem:[#allocation7 + $0x68] sm:$0xff]
        %v444 = vld [vmem:[#allocation7 + $0x70] sm:$0xff]
        %v445 = vld [vmem:[#allocation7 + $0x78] sm:$0xff]
        %v446 = vld [vmem:[#allocation7 + $0x80] sm:$0xff]
        %v447 = vld [vmem:[#allocation7 + $0x88] sm:$0xff]
        %v448 = vld [vmem:[#allocation7 + $0x90] sm:$0xff]
        %v449 = vld [vmem:[#allocation7 + $0x98] sm:$0xff]
        %v450 = vld [vmem:[#allocation7 + $0xa0] sm:$0xff]
        %v451 = vld [vmem:[#allocation7 + $0xa8] sm:$0xff]
        %v452 = vld [vmem:[#allocation7 + $0xb0] sm:$0xff]
        %v453 = vld [vmem:[#allocation7 + $0xb8] sm:$0xff]
        %v454 = vld [vmem:[#allocation7 + $0xc0] sm:$0xff]
        %v455 = vld [vmem:[#allocation7 + $0xc8] sm:$0xff]
        %v456 = vld [vmem:[#allocation7 + $0xd0] sm:$0xff]
        %v457 = vld [vmem:[#allocation7 + $0xd8] sm:$0xff]
        %v458 = vld [vmem:[#allocation7 + $0xe0] sm:$0xff]
        %v459 = vld [vmem:[#allocation7 + $0xe8] sm:$0xff]
        %v460 = vld [vmem:[#allocation7 + $0xf0] sm:$0xff]
        %v461 = vld [vmem:[#allocation7 + $0xf8] sm:$0xff]
        %v462 = vld [vmem:[#allocation7 + $0x100] sm:$0xff]
        %v463 = vld [vmem:[#allocation7 + $0x108] sm:$0xff]
        %v464 = vld [vmem:[#allocation7 + $0x110] sm:$0xff]
        %v465 = vld [vmem:[#allocation7 + $0x118] sm:$0xff]
        %v466 = vld [vmem:[#allocation7 + $0x120] sm:$0xff]
        %v467 = vld [vmem:[#allocation7 + $0x128] sm:$0xff]
        %v468 = vld [vmem:[#allocation7 + $0x130] sm:$0xff]
        %v469 = vld [vmem:[#allocation7 + $0x138] sm:$0xff]
        %v470 = vld [vmem:[#allocation7 + $0x140] sm:$0xff]
        %v471 = vld [vmem:[#allocation7 + $0x148] sm:$0xff]
        %v472 = vld [vmem:[#allocation7 + $0x150] sm:$0xff]
        %v473 = vld [vmem:[#allocation7 + $0x158] sm:$0xff]
        %v474 = vld [vmem:[#allocation7 + $0x160] sm:$0xff]
        %v475 = vld [vmem:[#allocation7 + $0x168] sm:$0xff]
        %v476 = vld [vmem:[#allocation7 + $0x170] sm:$0xff]
        %v477 = vld [vmem:[#allocation7 + $0x178] sm:$0xff]
        %v478 = vld [vmem:[#allocation7 + $0x180] sm:$0xff]
        %v479 = vld [vmem:[#allocation7 + $0x188] sm:$0xff]
        %v480 = vld [vmem:[#allocation7 + $0x190] sm:$0xff]
        %v481 = vld [vmem:[#allocation7 + $0x198] sm:$0xff]
        %v482 = vld [vmem:[#allocation7 + $0x1a0] sm:$0xff]
        %v483 = vld [vmem:[#allocation7 + $0x1a8] sm:$0xff]
        %v484 = vld [vmem:[#allocation7 + $0x1b0] sm:$0xff]
        %v485 = vld [vmem:[#allocation7 + $0x1b8] sm:$0xff]
        %v486 = vld [vmem:[#allocation7 + $0x1c0] sm:$0xff]
        %v487 = vld [vmem:[#allocation7 + $0x1c8] sm:$0xff]
        %v488 = vld [vmem:[#allocation7 + $0x1d0] sm:$0xff]
        %v489 = vld [vmem:[#allocation7 + $0x1d8] sm:$0xff]
        %v490 = vld [vmem:[#allocation7 + $0x1e0] sm:$0xff]
        %v491 = vld [vmem:[#allocation7 + $0x1e8] sm:$0xff]
        %v492 = vld [vmem:[#allocation7 + $0x1f0] sm:$0xff]
        %v493 = vld [vmem:[#allocation7 + $0x1f8] sm:$0xff]
        %v495 = vlaneseq
        %v496 = vshrl.u32 %v495, 7
        %v497 = vsub.s32 0, %v496
        %v498 = vrot.slane %v253, %v497
        %v499 = vlaneseq
        %v500 = vshrl.u32 %v499, 7
        %v501 = vsub.s32 1, %v500
        %v502 = vrot.slane %v253, %v501
        %505 = vmatprep.subr.mxu0 %v431
        %506 = vmatpush1.msra.mxu0 %v430
        %507 = vmatprep.subr.mxu0 %v433
        %508 = vmatpush1.msra.mxu0 %v432
        %509 = vmatprep.subr.mxu0 %v435
        %510 = vmatpush1.msra.mxu0 %v434
        %511 = vmatprep.subr.mxu0 %v437
        %512 = vmatpush1.msra.mxu0 %v436
        %513 = vmatprep.subr.mxu0 %v439
        %514 = vmatpush1.msra.mxu0 %v438
        %515 = vmatprep.subr.mxu0 %v441
        %516 = vmatpush1.msra.mxu0 %v440
        %517 = vmatprep.subr.mxu0 %v443
        %518 = vmatpush1.msra.mxu0 %v442
        %519 = vmatprep.subr.mxu0 %v445
        %520 = vmatpush1.msra.mxu0 %v444
        %521 = vmatprep.subr.mxu0 %v447
        %522 = vmatpush1.msra.mxu0 %v446
        %523 = vmatprep.subr.mxu0 %v449
        %524 = vmatpush1.msra.mxu0 %v448
        %525 = vmatprep.subr.mxu0 %v451
        %526 = vmatpush1.msra.mxu0 %v450
        %527 = vmatprep.subr.mxu0 %v453
        %528 = vmatpush1.msra.mxu0 %v452
        %529 = vmatprep.subr.mxu0 %v455
        %530 = vmatpush1.msra.mxu0 %v454
        %531 = vmatprep.subr.mxu0 %v457
        %532 = vmatpush1.msra.mxu0 %v456
        %533 = vmatprep.subr.mxu0 %v459
        %534 = vmatpush1.msra.mxu0 %v458
        %535 = vmatprep.subr.mxu0 %v461
        %536 = vmatpush1.msra.mxu0 %v460
        %537 = vmatprep.subr.mxu0 %v463
        %538 = vmatpush1.msra.mxu0 %v462
        %539 = vmatprep.subr.mxu0 %v465
        %540 = vmatpush1.msra.mxu0 %v464
        %541 = vmatprep.subr.mxu0 %v467
        %542 = vmatpush1.msra.mxu0 %v466
        %543 = vmatprep.subr.mxu0 %v469
        %544 = vmatpush1.msra.mxu0 %v468
        %545 = vmatprep.subr.mxu0 %v471
        %546 = vmatpush1.msra.mxu0 %v470
        %547 = vmatprep.subr.mxu0 %v473
        %548 = vmatpush1.msra.mxu0 %v472
        %549 = vmatprep.subr.mxu0 %v475
        %550 = vmatpush1.msra.mxu0 %v474
        %551 = vmatprep.subr.mxu0 %v477
        %552 = vmatpush1.msra.mxu0 %v476
        %553 = vmatprep.subr.mxu0 %v479
        %554 = vmatpush1.msra.mxu0 %v478
        %555 = vmatprep.subr.mxu0 %v481
        %556 = vmatpush1.msra.mxu0 %v480
        %557 = vmatprep.subr.mxu0 %v483
        %558 = vmatpush1.msra.mxu0 %v482
        %559 = vmatprep.subr.mxu0 %v485
        %560 = vmatpush1.msra.mxu0 %v484
        %561 = vmatprep.subr.mxu0 %v487
        %562 = vmatpush1.msra.mxu0 %v486
        %563 = vmatprep.subr.mxu0 %v489
        %564 = vmatpush1.msra.mxu0 %v488
        %565 = vmatprep.subr.mxu0 %v491
        %566 = vmatpush1.msra.mxu0 %v490
        %567 = vmatprep.subr.mxu0 %v493
        %568 = vmatpush1.msra.mxu0 %v492
        %569 = vmatprep.mubr.f32.mxu0 %v423
        %570 = vmatmul.mubr.f32.gmra.mrb[0].mxu0 %v422
        %v571 = vpop.f32.mrb[0].mxu0
        %v572 = vadd.f32 %v498, %v571
        %v573 = vpop.f32.mrb[0].mxu0
        %v574 = vadd.f32 %v502, %v573
        %575 = vmatprep.mubr.f32.mxu0 %v425
        %576 = vmatmul.mubr.f32.gmra.mrb[0].mxu0 %v424
        %v577 = vpop.f32.mrb[0].mxu0
        %v578 = vadd.f32 %v498, %v577
        %v579 = vpop.f32.mrb[0].mxu0
        %v580 = vadd.f32 %v502, %v579
        %581 = vmatprep.mubr.f32.mxu0 %v427
        %582 = vmatmul.mubr.f32.gmra.mrb[0].mxu0 %v426
        %v583 = vpop.f32.mrb[0].mxu0
        %v584 = vadd.f32 %v498, %v583
        %v585 = vpop.f32.mrb[0].mxu0
        %v586 = vadd.f32 %v502, %v585
        %587 = vmatprep.mubr.f32.mxu0 %v429
        %588 = vmatmul.mubr.f32.gmra.mrb[0].mxu0 %v428
        %v589 = vpop.f32.mrb[0].mxu0
        %v590 = vadd.f32 %v498, %v589
        %v591 = vpop.f32.mrb[0].mxu0
        %v592 = vadd.f32 %v502, %v591
        %593 = vdwg.mxu0
        %v594 = vadd.f32 %v572, %v368
        %v595 = vadd.f32 %v574, %v370
        %v596 = vadd.f32 %v578, %v374
        %v597 = vadd.f32 %v580, %v376
        %v598 = vadd.f32 %v584, %v380
        %v599 = vadd.f32 %v586, %v382
        %v600 = vadd.f32 %v590, %v386
        %v601 = vadd.f32 %v592, %v388
        %v602 = vadd.f32 %v594, %v595
        %603 = vadd.xlane.f32.xlu0 %v602
        %v604 = vpop.xlane.xlu0 %603
        %v605 = vadd.f32 %v596, %v597
        %606 = vadd.xlane.f32.xlu0 %v605
        %v607 = vpop.xlane.xlu0 %606
        %v608 = vadd.f32 %v598, %v599
        %609 = vadd.xlane.f32.xlu0 %v608
        %v610 = vpop.xlane.xlu0 %609
        %v611 = vadd.f32 %v600, %v601
        %612 = vadd.xlane.f32.xlu0 %v611
        %v613 = vpop.xlane.xlu0 %612
        %v614 = vrcp.pop 256.0
        %v615 = vmul.f32 %v604, %v614
        %v616 = vmul.f32 %v607, %v614
        %v617 = vmul.f32 %v610, %v614
        %v618 = vmul.f32 %v613, %v614
        %v619 = vsub.f32 %v594, %v615
        %v620 = vsub.f32 %v595, %v615
        %v621 = vsub.f32 %v596, %v616
        %v622 = vsub.f32 %v597, %v616
        %v623 = vsub.f32 %v598, %v617
        %v624 = vsub.f32 %v599, %v617
        %v625 = vsub.f32 %v600, %v618
        %v626 = vsub.f32 %v601, %v618
        %v627 = vmul.f32 %v619, %v619
        %v628 = vmul.f32 %v620, %v620
        %v629 = vmul.f32 %v621, %v621
        %v630 = vmul.f32 %v622, %v622
        %v631 = vmul.f32 %v623, %v623
        %v632 = vmul.f32 %v624, %v624
        %v633 = vmul.f32 %v625, %v625
        %v634 = vmul.f32 %v626, %v626
        %v635 = vadd.f32 %v627, %v628
        %636 = vadd.xlane.f32.xlu0 %v635
        %v637 = vpop.xlane.xlu0 %636
        %v638 = vadd.f32 %v629, %v630
        %639 = vadd.xlane.f32.xlu0 %v638
        %v640 = vpop.xlane.xlu0 %639
        %v641 = vadd.f32 %v631, %v632
        %642 = vadd.xlane.f32.xlu0 %v641
        %v643 = vpop.xlane.xlu0 %642
        %v644 = vadd.f32 %v633, %v634
        %645 = vadd.xlane.f32.xlu0 %v644
        %v646 = vpop.xlane.xlu0 %645
        %v647 = vmul.f32 %v637, %v614
        %v648 = vmul.f32 %v640, %v614
        %v649 = vmul.f32 %v643, %v614
        %v650 = vmul.f32 %v646, %v614
        %v651 = vadd.f32 %v647, 1e-05
        %v652 = vadd.f32 %v648, 1e-05
        %v653 = vadd.f32 %v649, 1e-05
        %v654 = vadd.f32 %v650, 1e-05
        %v655 = vrsqrt.pop %v651
        %v656 = vrsqrt.pop %v652
        %v657 = vrsqrt.pop %v653
        %v658 = vrsqrt.pop %v654
        %v659 = vmul.f32 %v619, %v655
        %v660 = vmul.f32 %v620, %v655
        %v661 = vmul.f32 %v621, %v656
        %v662 = vmul.f32 %v622, %v656
        %v663 = vmul.f32 %v623, %v657
        %v664 = vmul.f32 %v624, %v657
        %v665 = vmul.f32 %v625, %v658
        %v666 = vmul.f32 %v626, %v658
        %v668 = vlaneseq
        %v669 = vshrl.u32 %v668, 7
        %v670 = vsub.s32 0, %v669
        %v671 = vrot.slane %v255, %v670
        %v672 = vlaneseq
        %v673 = vshrl.u32 %v672, 7
        %v674 = vsub.s32 1, %v673
        %v675 = vrot.slane %v255, %v674
        %v678 = vmul.f32 %v659, %v671
        %v679 = vmul.f32 %v660, %v675
        %v680 = vmul.f32 %v661, %v671
        %v681 = vmul.f32 %v662, %v675
        %v682 = vmul.f32 %v663, %v671
        %v683 = vmul.f32 %v664, %v675
        %v684 = vmul.f32 %v665, %v671
        %v685 = vmul.f32 %v666, %v675
        %v687 = vlaneseq
        %v688 = vshrl.u32 %v687, 7
        %v689 = vsub.s32 0, %v688
        %v690 = vrot.slane %v257, %v689
        %v691 = vlaneseq
        %v692 = vshrl.u32 %v691, 7
        %v693 = vsub.s32 1, %v692
        %v694 = vrot.slane %v257, %v693
        %v697 = vadd.f32 %v678, %v690
        %v698 = vadd.f32 %v679, %v694
        %v699 = vadd.f32 %v680, %v690
        %v700 = vadd.f32 %v681, %v694
        %v701 = vadd.f32 %v682, %v690
        %v702 = vadd.f32 %v683, %v694
        %v703 = vadd.f32 %v684, %v690
        %v704 = vadd.f32 %v685, %v694
        %705 = vst [vmem:[%s244] sm:$0xff] %v697
        %706 = vst [vmem:[%s244 + $0x8] sm:$0xff] %v698
        %707 = vst [vmem:[%s244 + $0x10] sm:$0xff] %v699
        %708 = vst [vmem:[%s244 + $0x18] sm:$0xff] %v700
        %709 = vst [vmem:[%s244 + $0x20] sm:$0xff] %v701
        %710 = vst [vmem:[%s244 + $0x28] sm:$0xff] %v702
        %711 = vst [vmem:[%s244 + $0x30] sm:$0xff] %v703
        %712 = vst [vmem:[%s244 + $0x38] sm:$0xff] %v704
        %s713 = sand.u32 %s119, 1
        %s714 = scalar_lea.sflag [#allocation4], %s713
        %s715 = sand.u32 %s119, 1
        %s716 = smul.addr %s715, 64
        %s717 = scalar_lea.vmem [#allocation8], %s716
        // Predicated region
        $region49: #{tpu_custom_call.1} parent=35 // pred_check
          %p718 = pneg %p129
        $region50: #{tpu_custom_call.1} parent=35 // pred_check_branch
          %720 = sbr.rel (%p718) target = $region52
        $region51: #{tpu_custom_call.1} parent=35 // pred_region
          %s721 = smul.u32 4, %s22
          %s723 = ssub.s32 1024, 1024
          %724 = vsyncadd %s714, %s723
          %s725 = smul.addr %s721, 2
          %s726 = smul.addr %s725, 128
          %s727 = scalar_lea.hbm %s4, %s726
          %s728 = sshll.u32 %s717, 4
          %s729 = int_to_ptr.vmem [resolvable:$true] %s728
          %734 = dma.vmem_to_hbm [thread:$0]  %s729, 1024, %s727, %s714, 256, 256, 16
        $region52: #{tpu_custom_call.1} parent=35 // pred_fallthru
          _
      $region36: #{tpu_custom_call.1} parent=5 // pred_fallthru
        _
      %p735 = scmp.le.s32.totalorder 2, %s17
      // Predicated region
      $region53: #{tpu_custom_call.1} parent=5 // pred_check
        %p736 = pneg %p735
      $region54: #{tpu_custom_call.1} parent=5 // pred_check_branch
        %738 = sbr.rel (%p736) target = $region56
      $region55: #{tpu_custom_call.1} parent=5 // pred_region
        %s739 = ssub.s32 %s17, 2
        // Predicated region
        $region57: #{tpu_custom_call.1} parent=55 // pred_check
          %p740 = pneg %p135
        $region58: #{tpu_custom_call.1} parent=55 // pred_check_branch
          %742 = sbr.rel (%p740) target = $region60
        $region59: #{tpu_custom_call.1} parent=55 // pred_region
          %s743 = sand.u32 %s120, 1
          %s744 = scalar_lea.sflag [#allocation4], %s743
          %s745 = sand.u32 %s120, 1
          %s746 = smul.addr %s745, 64
          %s747 = scalar_lea.vmem [#allocation8], %s746
          %748 = dma.done %s744, 1024
        $region60: #{tpu_custom_call.1} parent=55 // pred_fallthru
          _
      $region56: #{tpu_custom_call.1} parent=5 // pred_fallthru
        _
    $region6: #{tpu_custom_call.1} parent=1 // loop_footer
      %s21 = sadd.s32 1, %s17
    $region7: #{tpu_custom_call.1} parent=1 // loop_footer_branch
      %16 = sbr.rel target = $region3
    $region8: #{tpu_custom_call.1} parent=1 // loop_exit
      _
    %749 = vsyncpa [#allocation3], 1
    %s750 = scalar_lea.sflag [#allocation3], 1
    %751 = vsyncpa %s750, 1
    %752 = vsyncpa [#allocation6], 1
    %753 = vsyncpa [#allocation4], 1
    %s754 = scalar_lea.sflag [#allocation4], 1
    %755 = vsyncpa %s754, 1

</llo_original>
